<compile_context>
chip_gen: v7x
topology: tpu7x:2x2x1
jax: 0.10.0
libtpu: 0.0.40
codegen_flags: <defaults>
</compile_context>

<pallas_src>
from math import pi

import numpy as np
import jax
import jax.numpy as jnp
from jax.experimental import pallas as pl
from jax.experimental.pallas import tpu as pltpu


# ----------------------- reference kernel functions (numpy) -----------------
def box(x):
    return ((-0.5 <= x) & (x < 0.5)) * 1.0


def cubic(x):
    absx = np.abs(x)
    absx2 = absx ** 2
    absx3 = absx ** 3
    return (1.5 * absx3 - 2.5 * absx2 + 1) * (absx <= 1) + \
           (-0.5 * absx3 + 2.5 * absx2 - 4 * absx + 2) * ((1 < absx) & (absx <= 2))


def lanczos2(x):
    return (np.sin(pi * x) * np.sin(pi * x / 2) + np.finfo(np.float32).eps) / \
           (pi ** 2 * x ** 2 / 2 + np.finfo(np.float32).eps) * (abs(x) < 2)


def lanczos3(x):
    return (np.sin(pi * x) * np.sin(pi * x / 3) + np.finfo(np.float32).eps) / \
           (pi ** 2 * x ** 2 / 3 + np.finfo(np.float32).eps) * (abs(x) < 3)


def linear(x):
    return (x + 1) * ((-1 <= x) & (x < 0)) + (1 - x) * ((0 <= x) & (x <= 1))


# ----------------------- Resizer precompute (numpy, same math) --------------
def fix_scale_and_size(input_shape, output_shape, scale_factor):
    if scale_factor is not None:
        if np.isscalar(scale_factor) and len(input_shape) > 1:
            scale_factor = [scale_factor, scale_factor]
        scale_factor = list(scale_factor)
        scale_factor = [1] * (len(input_shape) - len(scale_factor)) + scale_factor
    if output_shape is not None:
        output_shape = list(input_shape[len(output_shape):]) + list(np.uint(np.array(output_shape)))
    if scale_factor is None:
        scale_factor = 1.0 * np.array(output_shape) / np.array(input_shape)
    if output_shape is None:
        output_shape = np.uint(np.ceil(np.array(input_shape) * np.array(scale_factor)))
    return scale_factor, output_shape


def contributions(in_length, out_length, scale, kernel, kernel_width, antialiasing):
    fixed_kernel = (lambda arg: scale * kernel(scale * arg)) if antialiasing else kernel
    kernel_width *= 1.0 / scale if antialiasing else 1.0
    out_coordinates = np.arange(1, out_length + 1)
    shifted_out_coordinates = out_coordinates - (out_length - in_length * scale) / 2
    match_coordinates = shifted_out_coordinates / scale + 0.5 * (1 - 1 / scale)
    left_boundary = np.floor(match_coordinates - kernel_width / 2)
    expanded_kernel_width = np.ceil(kernel_width) + 2
    field_of_view = np.squeeze(
        np.int16(np.expand_dims(left_boundary, axis=1) + np.arange(expanded_kernel_width) - 1))
    weights = fixed_kernel(1.0 * np.expand_dims(match_coordinates, axis=1) - field_of_view - 1)
    sum_weights = np.sum(weights, axis=1)
    sum_weights[sum_weights == 0] = 1.0
    weights = 1.0 * weights / np.expand_dims(sum_weights, axis=1)
    mirror = np.uint(np.concatenate((np.arange(in_length), np.arange(in_length - 1, -1, step=-1))))
    field_of_view = mirror[np.mod(field_of_view, mirror.shape[0])]
    non_zero_out_pixels = np.nonzero(np.any(weights, axis=0))
    weights = np.squeeze(weights[:, non_zero_out_pixels])
    field_of_view = np.squeeze(field_of_view[:, non_zero_out_pixels])
    return weights, field_of_view


def build_resize_plan(in_shape, scale_factor=None, output_shape=None,
                      kernel=None, antialiasing=True):
    """Return (R_h | None, R_w | None, output_shape, h_first).

    R_dim is a dense (out_len, in_len) f32 matrix such that
      out[b,c,o,p] = sum_h sum_w R_h[o,h] * R_w[p,w] * x[b,c,h,w],
    identical to the torch forward (gather over field_of_view + weighted sum):
    duplicate mirrored indices are scatter-added.  A spatial axis with scale 1
    returns None (no contraction needed).  `h_first` mirrors torch's
    sorted_dims application order (most-shrinking axis first).
    """
    scale_factor, output_shape = fix_scale_and_size(in_shape, output_shape, scale_factor)
    method, kernel_width = {
        'cubic': (cubic, 4.0), 'lanczos2': (lanczos2, 4.0), 'lanczos3': (lanczos3, 6.0),
        'box': (box, 1.0), 'linear': (linear, 2.0), None: (cubic, 4.0)}.get(kernel)
    antialiasing = bool(antialiasing) and bool(np.any(np.array(scale_factor) < 1))
    sorted_dims = np.argsort(np.array(scale_factor))
    sorted_dims = [int(d) for d in sorted_dims if scale_factor[d] != 1]

    # This port resizes the spatial dims of an NCHW tensor (dims 2 and 3),
    # which is what the torch module produces for scalar / 2-elem scale factors.
    mats = {2: None, 3: None}
    for dim in (2, 3):
        if dim not in sorted_dims:
            continue  # identity axis: skip the matmul entirely
        in_len = int(in_shape[dim])
        out_len = int(output_shape[dim])
        w, fov = contributions(in_len, out_len, scale_factor[dim],
                               method, kernel_width, antialiasing)
        w = np.atleast_2d(np.float32(w))
        fov = np.atleast_2d(np.int64(fov))
        R = np.zeros((out_len, in_len), dtype=np.float32)
        # scatter-add: R[o, fov[o,k]] += w[o,k]  (== tap-by-tap torch sum)
        np.add.at(R, (np.arange(out_len)[:, None], fov), w)
        mats[dim] = R

    spatial_order = [d for d in sorted_dims if d in (2, 3)]
    h_first = True if not spatial_order else (spatial_order[0] == 2)
    return mats[2], mats[3], tuple(int(s) for s in output_shape), h_first


# ----------------------------- Pallas kernel --------------------------------
def _vmem_capacity_bytes():
    try:
        return int(pltpu.get_tpu_info().vmem_capacity_bytes)
    except Exception:
        return 64 << 20  # conservative default (v7x per-TensorCore VMEM)


def _choose_bc_block(bc, h_in, w_in, h_out, w_out, itemsize):
    """Pick the fused batch*channel block size and the vmem limit.

    Footprint accounting: 2x input block + 2x output block (double-buffered by
    the BlockSpec pipeline) + both resize matrices + ~2 f32 intermediates.
    Keeps >= 4 grid steps when B*C allows it (>= 2 per TensorCore on v7x) so
    the pipeline always has an i+1 block to prefetch.
    """
    cap = _vmem_capacity_bytes()
    budget = cap // 2
    f32 = 4
    mats = (h_out * h_in + w_in * w_out) * f32 * 2

    def footprint(blk):
        in_b = 2 * blk * h_in * w_in * itemsize
        out_b = 2 * blk * h_out * w_out * itemsize
        inter = 2 * blk * max(h_in * w_out, h_out * w_in, h_out * w_out) * f32
        return in_b + out_b + inter + mats

    max_unroll = 8                    # bounds the trace-time per-slice unroll
    min_steps = min(4, bc)            # >= 2 steps per TC on dual-TC chips
    blk = 1
    for cand in range(1, min(bc, max_unroll) + 1):
        if footprint(cand) <= budget and pl.cdiv(bc, cand) >= min_steps:
            blk = cand
    vmem_limit = int(min(cap * 3 // 4, 112 << 20))
    return blk, vmem_limit


def pallas_resize(x, R_h, R_w, h_first=True):
    """out[b,c,o,p] = sum_{h,w} R_h[o,h] R_w[p,w] x[b,c,h,w]  (NCHW)."""
    B, C, H_in, W_in = x.shape
    has_h = R_h is not None
    has_w = R_w is not None
    if not has_h and not has_w:
        return x

    H_out = int(R_h.shape[0]) if has_h else H_in
    W_out = int(R_w.shape[0]) if has_w else W_in
    bc = B * C
    dtype = x.dtype

    bc_blk, vmem_limit = _choose_bc_block(bc, H_in, W_in, H_out, W_out,
                                          jnp.dtype(dtype).itemsize)
    n_blocks = pl.cdiv(bc, bc_blk)
    bc_pad = n_blocks * bc_blk

    xr = jnp.asarray(x).reshape(bc, H_in, W_in)          # contiguous, free
    if bc_pad != bc:
        xr = jnp.pad(xr, ((0, bc_pad - bc), (0, 0), (0, 0)))  # ragged tail -> zero slices

    rh = jnp.asarray(np.ascontiguousarray(R_h), dtype=jnp.float32) if has_h else None      # (H_out, H_in)
    rw_t = jnp.asarray(np.ascontiguousarray(R_w.T), dtype=jnp.float32) if has_w else None  # (W_in, W_out)

    def kern(*refs):
        refs = list(refs)
        x_ref = refs.pop(0)
        rh_ref = refs.pop(0) if has_h else None
        rw_ref = refs.pop(0) if has_w else None
        o_ref = refs.pop(0)

        rh_m = rh_ref[...] if has_h else None            # resident, loaded once
        rw_m = rw_ref[...] if has_w else None
        order = ("h", "w") if h_first else ("w", "h")

        # Per-slice 2D MXU matmuls; slicing/storing only along the leading
        # (untiled) axis -> no relayout copies, no packing, lane axis = W.
        for b in range(bc_blk):
            t = x_ref[b]                                  # (H_in, W_in)
            for axis in order:
                if axis == "h" and has_h:
                    t = jnp.dot(rh_m, t, preferred_element_type=jnp.float32)
                elif axis == "w" and has_w:
                    t = jnp.dot(t, rw_m, preferred_element_type=jnp.float32)
            o_ref[b] = t.astype(o_ref.dtype)              # (H_out, W_out) slab

    def run(use_buffered):
        mat_kw = dict(pipeline_mode=pl.Buffered(1)) if use_buffered else {}
        in_specs = [pl.BlockSpec((bc_blk, H_in, W_in), lambda i: (i, 0, 0))]
        args = [xr]
        if has_h:
            in_specs.append(pl.BlockSpec((H_out, H_in), lambda i: (0, 0), **mat_kw))
            args.append(rh)
        if has_w:
            in_specs.append(pl.BlockSpec((W_in, W_out), lambda i: (0, 0), **mat_kw))
            args.append(rw_t)
        return pl.pallas_call(
            kern,
            out_shape=jax.ShapeDtypeStruct((bc_pad, H_out, W_out), dtype),
            grid_spec=pltpu.PrefetchScalarGridSpec(
                num_scalar_prefetch=0,
                grid=(n_blocks,),
                in_specs=in_specs,
                out_specs=pl.BlockSpec((bc_blk, H_out, W_out), lambda i: (i, 0, 0)),
            ),
            compiler_params=pltpu.CompilerParams(
                dimension_semantics=("parallel",),
                vmem_limit_bytes=vmem_limit),
        )(*args)

    try:
        out3 = run(True)          # Buffered(1) on the resident resize matrices
    except Exception:
        out3 = run(False)         # fallback if pipeline_mode is unsupported

    return out3[:bc].reshape(B, C, H_out, W_out)


# --------------------------------- demo --------------------------------------
if __name__ == "__main__":
    B, C, H, W = 2, 4, 16, 16
    scale = 0.5  # downscale 16x16 -> 8x8, cubic kernel, antialiasing on

    key = jax.random.PRNGKey(0)
    x = jax.random.normal(key, (B, C, H, W), dtype=jnp.float32)

    R_h, R_w, out_shape, h_first = build_resize_plan(
        (B, C, H, W), scale_factor=scale, kernel=None, antialiasing=True)

    out = pallas_resize(x, R_h, R_w, h_first)
    out = jax.block_until_ready(out)

    # float64 reference, applied in the torch sorted_dims order (same as kernel).
    x_np = np.asarray(x, dtype=np.float64)
    ref = x_np
    for d in ((2, 3) if h_first else (3, 2)):
        R = R_h if d == 2 else R_w
        if R is None:
            continue
        if d == 2:
            ref = np.einsum("oh,bchw->bcow", R.astype(np.float64), ref)
        else:
            ref = np.einsum("pw,bchw->bchp", R.astype(np.float64), ref)

    assert out.shape == (B, C, out_shape[2], out_shape[3]), out.shape
    np.testing.assert_allclose(np.asarray(out), ref, rtol=1e-4, atol=1e-5)
    print("KERNEL_OK")
</pallas_src>

<mosaic_0001>
module attributes {stable_mosaic.version = 11 : i64} {
  func.func @kern(%arg0: i32, %arg1: memref<2x16x16xf32, #tpu.memory_space<vmem>>, %arg2: memref<8x16xf32, #tpu.memory_space<vmem>>, %arg3: memref<16x8xf32, #tpu.memory_space<vmem>>, %arg4: memref<2x8x8xf32, #tpu.memory_space<vmem>>) attributes {dimension_semantics = [#tpu.dimension_semantics<parallel>], iteration_bounds = array<i64: 4>, scalar_prefetch = 0 : i64, scratch_operands = 0 : i64, tpu.core_type = #tpu.core_type<tc>, window_params = [{transform_indices = @transform_0, window_bounds = array<i64: 2, 16, 16>}, {pipeline_mode = #tpu.pipeline_mode<synchronous>, transform_indices = @transform_1, window_bounds = array<i64: 8, 16>}, {pipeline_mode = #tpu.pipeline_mode<synchronous>, transform_indices = @transform_2, window_bounds = array<i64: 16, 8>}, {transform_indices = @transform_3, window_bounds = array<i64: 2, 8, 8>}]} {
    %c0 = arith.constant 0 : index
    %c0_0 = arith.constant 0 : index
    %0 = vector.load %arg2[%c0, %c0_0] : memref<8x16xf32, #tpu.memory_space<vmem>>, vector<8x16xf32>
    %c0_1 = arith.constant 0 : index
    %c0_2 = arith.constant 0 : index
    %1 = vector.load %arg3[%c0_1, %c0_2] : memref<16x8xf32, #tpu.memory_space<vmem>>, vector<16x8xf32>
    %c0_3 = arith.constant 0 : index
    %c0_4 = arith.constant 0 : index
    %c0_5 = arith.constant 0 : index
    %2 = vector.load %arg1[%c0_3, %c0_4, %c0_5] : memref<2x16x16xf32, #tpu.memory_space<vmem>>, vector<1x16x16xf32>
    %3 = vector.shape_cast %2 : vector<1x16x16xf32> to vector<16x16xf32>
    %cst = arith.constant dense<0.000000e+00> : vector<16x8xf32>
    %4 = tpu.matmul %3, %1, %cst {dimension_numbers = #tpu.dot_dimension_numbers<[1], [0], [0], [1], [0, 0, 1, 1], [], []>} : vector<16x16xf32>, vector<16x8xf32>, vector<16x8xf32> -> vector<16x8xf32>
    %cst_6 = arith.constant dense<0.000000e+00> : vector<8x8xf32>
    %5 = tpu.matmul %0, %4, %cst_6 {dimension_numbers = #tpu.dot_dimension_numbers<[1], [0], [0], [1], [0, 0, 1, 1], [], []>} : vector<8x16xf32>, vector<16x8xf32>, vector<8x8xf32> -> vector<8x8xf32>
    %c0_7 = arith.constant 0 : index
    %c0_8 = arith.constant 0 : index
    %c0_9 = arith.constant 0 : index
    %6 = vector.load %arg4[%c0_7, %c0_8, %c0_9] : memref<2x8x8xf32, #tpu.memory_space<vmem>>, vector<1x8x8xf32>
    %7 = vector.shape_cast %6 : vector<1x8x8xf32> to vector<8x8xf32>
    %8 = vector.shape_cast %5 : vector<8x8xf32> to vector<1x8x8xf32>
    tpu.vector_store %arg4[%c0_7, %c0_8, %c0_9], %8 {strides = array<i32>} : memref<2x8x8xf32, #tpu.memory_space<vmem>>, vector<1x8x8xf32>,
    %c1 = arith.constant 1 : index
    %c0_10 = arith.constant 0 : index
    %c0_11 = arith.constant 0 : index
    %9 = vector.load %arg1[%c1, %c0_10, %c0_11] : memref<2x16x16xf32, #tpu.memory_space<vmem>>, vector<1x16x16xf32>
    %10 = vector.shape_cast %9 : vector<1x16x16xf32> to vector<16x16xf32>
    %cst_12 = arith.constant dense<0.000000e+00> : vector<16x8xf32>
    %11 = tpu.matmul %10, %1, %cst_12 {dimension_numbers = #tpu.dot_dimension_numbers<[1], [0], [0], [1], [0, 0, 1, 1], [], []>} : vector<16x16xf32>, vector<16x8xf32>, vector<16x8xf32> -> vector<16x8xf32>
    %cst_13 = arith.constant dense<0.000000e+00> : vector<8x8xf32>
    %12 = tpu.matmul %0, %11, %cst_13 {dimension_numbers = #tpu.dot_dimension_numbers<[1], [0], [0], [1], [0, 0, 1, 1], [], []>} : vector<8x16xf32>, vector<16x8xf32>, vector<8x8xf32> -> vector<8x8xf32>
    %c1_14 = arith.constant 1 : index
    %c0_15 = arith.constant 0 : index
    %c0_16 = arith.constant 0 : index
    %13 = vector.load %arg4[%c1_14, %c0_15, %c0_16] : memref<2x8x8xf32, #tpu.memory_space<vmem>>, vector<1x8x8xf32>
    %14 = vector.shape_cast %13 : vector<1x8x8xf32> to vector<8x8xf32>
    %15 = vector.shape_cast %12 : vector<8x8xf32> to vector<1x8x8xf32>
    tpu.vector_store %arg4[%c1_14, %c0_15, %c0_16], %15 {strides = array<i32>} : memref<2x8x8xf32, #tpu.memory_space<vmem>>, vector<1x8x8xf32>,
    return
  }
  func.func @transform_0(%arg0: i32) -> (i32, i32, i32) {
    %c0_i32 = arith.constant 0 : i32
    %c0_i32_0 = arith.constant 0 : i32
    %c0_i32_1 = arith.constant 0 : i32
    return %arg0, %c0_i32, %c0_i32_0 : i32, i32, i32
  }
  func.func @transform_1(%arg0: i32) -> (i32, i32) {
    %c0_i32 = arith.constant 0 : i32
    %c0_i32_0 = arith.constant 0 : i32
    %c0_i32_1 = arith.constant 0 : i32
    return %c0_i32, %c0_i32_0 : i32, i32
  }
  func.func @transform_2(%arg0: i32) -> (i32, i32) {
    %c0_i32 = arith.constant 0 : i32
    %c0_i32_0 = arith.constant 0 : i32
    %c0_i32_1 = arith.constant 0 : i32
    return %c0_i32, %c0_i32_0 : i32, i32
  }
  func.func @transform_3(%arg0: i32) -> (i32, i32, i32) {
    %c0_i32 = arith.constant 0 : i32
    %c0_i32_0 = arith.constant 0 : i32
    %c0_i32_1 = arith.constant 0 : i32
    return %arg0, %c0_i32, %c0_i32_0 : i32, i32, i32
  }
}

module attributes {stable_mosaic.version = 11 : i64} {
  func.func @kern(%arg0: i32, %arg1: memref<2x16x16xf32, #tpu.memory_space<vmem>>, %arg2: memref<8x16xf32, #tpu.memory_space<vmem>>, %arg3: memref<16x8xf32, #tpu.memory_space<vmem>>, %arg4: memref<2x8x8xf32, #tpu.memory_space<vmem>>) attributes {dimension_semantics = [#tpu.dimension_semantics<parallel>], iteration_bounds = array<i64: 4>, scalar_prefetch = 0 : i64, scratch_operands = 0 : i64, tpu.core_type = #tpu.core_type<tc>, window_params = [{transform_indices = @transform_0, window_bounds = array<i64: 2, 16, 16>}, {pipeline_mode = #tpu.pipeline_mode<synchronous>, transform_indices = @transform_1, window_bounds = array<i64: 8, 16>}, {pipeline_mode = #tpu.pipeline_mode<synchronous>, transform_indices = @transform_2, window_bounds = array<i64: 16, 8>}, {transform_indices = @transform_3, window_bounds = array<i64: 2, 8, 8>}]} {
    %c0 = arith.constant 0 : index
    %c0_0 = arith.constant 0 : index
    %0 = vector.load %arg2[%c0, %c0_0] : memref<8x16xf32, #tpu.memory_space<vmem>>, vector<8x16xf32>
    %c0_1 = arith.constant 0 : index
    %c0_2 = arith.constant 0 : index
    %1 = vector.load %arg3[%c0_1, %c0_2] : memref<16x8xf32, #tpu.memory_space<vmem>>, vector<16x8xf32>
    %c0_3 = arith.constant 0 : index
    %c0_4 = arith.constant 0 : index
    %c0_5 = arith.constant 0 : index
    %2 = vector.load %arg1[%c0_3, %c0_4, %c0_5] : memref<2x16x16xf32, #tpu.memory_space<vmem>>, vector<1x16x16xf32>
    %3 = vector.shape_cast %2 : vector<1x16x16xf32> to vector<16x16xf32>
    %cst = arith.constant dense<0.000000e+00> : vector<16x8xf32>
    %4 = tpu.matmul %3, %1, %cst {dimension_numbers = #tpu.dot_dimension_numbers<[1], [0], [0], [1], [0, 0, 1, 1], [], []>} : vector<16x16xf32>, vector<16x8xf32>, vector<16x8xf32> -> vector<16x8xf32>
    %cst_6 = arith.constant dense<0.000000e+00> : vector<8x8xf32>
    %5 = tpu.matmul %0, %4, %cst_6 {dimension_numbers = #tpu.dot_dimension_numbers<[1], [0], [0], [1], [0, 0, 1, 1], [], []>} : vector<8x16xf32>, vector<16x8xf32>, vector<8x8xf32> -> vector<8x8xf32>
    %c0_7 = arith.constant 0 : index
    %c0_8 = arith.constant 0 : index
    %c0_9 = arith.constant 0 : index
    %6 = vector.load %arg4[%c0_7, %c0_8, %c0_9] : memref<2x8x8xf32, #tpu.memory_space<vmem>>, vector<1x8x8xf32>
    %7 = vector.shape_cast %6 : vector<1x8x8xf32> to vector<8x8xf32>
    %8 = vector.shape_cast %5 : vector<8x8xf32> to vector<1x8x8xf32>
    tpu.vector_store %arg4[%c0_7, %c0_8, %c0_9], %8 {strides = array<i32>} : memref<2x8x8xf32, #tpu.memory_space<vmem>>, vector<1x8x8xf32>,
    %c1 = arith.constant 1 : index
    %c0_10 = arith.constant 0 : index
    %c0_11 = arith.constant 0 : index
    %9 = vector.load %arg1[%c1, %c0_10, %c0_11] : memref<2x16x16xf32, #tpu.memory_space<vmem>>, vector<1x16x16xf32>
    %10 = vector.shape_cast %9 : vector<1x16x16xf32> to vector<16x16xf32>
    %cst_12 = arith.constant dense<0.000000e+00> : vector<16x8xf32>
    %11 = tpu.matmul %10, %1, %cst_12 {dimension_numbers = #tpu.dot_dimension_numbers<[1], [0], [0], [1], [0, 0, 1, 1], [], []>} : vector<16x16xf32>, vector<16x8xf32>, vector<16x8xf32> -> vector<16x8xf32>
    %cst_13 = arith.constant dense<0.000000e+00> : vector<8x8xf32>
    %12 = tpu.matmul %0, %11, %cst_13 {dimension_numbers = #tpu.dot_dimension_numbers<[1], [0], [0], [1], [0, 0, 1, 1], [], []>} : vector<8x16xf32>, vector<16x8xf32>, vector<8x8xf32> -> vector<8x8xf32>
    %c1_14 = arith.constant 1 : index
    %c0_15 = arith.constant 0 : index
    %c0_16 = arith.constant 0 : index
    %13 = vector.load %arg4[%c1_14, %c0_15, %c0_16] : memref<2x8x8xf32, #tpu.memory_space<vmem>>, vector<1x8x8xf32>
    %14 = vector.shape_cast %13 : vector<1x8x8xf32> to vector<8x8xf32>
    %15 = vector.shape_cast %12 : vector<8x8xf32> to vector<1x8x8xf32>
    tpu.vector_store %arg4[%c1_14, %c0_15, %c0_16], %15 {strides = array<i32>} : memref<2x8x8xf32, #tpu.memory_space<vmem>>, vector<1x8x8xf32>,
    return
  }
  func.func @transform_0(%arg0: i32) -> (i32, i32, i32) {
    %c0_i32 = arith.constant 0 : i32
    %c0_i32_0 = arith.constant 0 : i32
    %c0_i32_1 = arith.constant 0 : i32
    return %arg0, %c0_i32, %c0_i32_0 : i32, i32, i32
  }
  func.func @transform_1(%arg0: i32) -> (i32, i32) {
    %c0_i32 = arith.constant 0 : i32
    %c0_i32_0 = arith.constant 0 : i32
    %c0_i32_1 = arith.constant 0 : i32
    return %c0_i32, %c0_i32_0 : i32, i32
  }
  func.func @transform_2(%arg0: i32) -> (i32, i32) {
    %c0_i32 = arith.constant 0 : i32
    %c0_i32_0 = arith.constant 0 : i32
    %c0_i32_1 = arith.constant 0 : i32
    return %c0_i32, %c0_i32_0 : i32, i32
  }
  func.func @transform_3(%arg0: i32) -> (i32, i32, i32) {
    %c0_i32 = arith.constant 0 : i32
    %c0_i32_0 = arith.constant 0 : i32
    %c0_i32_1 = arith.constant 0 : i32
    return %arg0, %c0_i32, %c0_i32_0 : i32, i32, i32
  }
}

</mosaic_0001>

<llo_original>
// kernel: tpu_custom_call.1
$region0: #{tpu_custom_call.1}
  #allocation0 [shape = 'u32[]', space=smem, size = 0x4, offset = 0x4, fixed_abs, tag = 'smem constant byte address 0x4 - core index']
  #allocation1 [shape = 'u32[144,128]{1,0:T(1,128)}', space=vmem, size = 0x12000, scoped, tag = 'internal scratch']
  %s0 = inlined_call_operand.hbm [shape: f32[8,16,16], index: 0, kind: input, shape index: {}]
  %s1 = inlined_call_operand.vmem [shape: f32[8,16], index: 1, kind: input, shape index: {}]
  %s2 = inlined_call_operand.vmem [shape: f32[16,8], index: 2, kind: input, shape index: {}]
  %s3 = inlined_call_operand.hbm [shape: f32[8,8,8], index: 3, kind: output, shape index: {}]
  %s4 = sld [smem:[#allocation0]]
  $region49: #{tpu_custom_call.1} parent=0
    _
  %s6 = ssub.s32 1, %s4
  %s7 = scalar_select 0, %s6, %s4
  $region1: #{tpu_custom_call.1} parent=0
    #allocation2 [shape = 'u8[32768]{0}', space=vmem, size = 0x8000, scoped, tag = 'input window, operand 0']
    #allocation3 [shape = 's32[2]{0}', space=sflag, size = 0x8, scoped, tag = 'scoped memory for tpu_custom_call.1']
    #allocation4 [shape = 's32[2]{0}', space=sflag, size = 0x8, scoped, tag = 'scoped memory for tpu_custom_call.1']
    #allocation5 [shape = 'u8[16384]{0}', space=vmem, size = 0x4000, scoped, tag = 'output window, operand 0']
    %8 = vsyncpa [#allocation3], 0
    %s9 = scalar_lea.sflag [#allocation3], 1
    %10 = vsyncpa %s9, 0
    %11 = vsyncpa [#allocation4], 0
    %s12 = scalar_lea.sflag [#allocation4], 1
    %13 = vsyncpa %s12, 0
    loop: start=0, step=1, limit=6
    $region2: #{tpu_custom_call.1} parent=1 // loop_pre_header
      _
    $region3: #{tpu_custom_call.1} parent=1 // loop_header
      %s15 = sphi 0, %s19
      %p16 = scmp.ge.s32.totalorder %s15, 6
      %s25 = sphi 0, %s27
      %s28 = sphi 0, %s25
      %s29 = sphi 0, %s28
      %s45 = sphi 0, %s29
      %s49 = sphi 0, %s49
      %s51 = sphi 0, %s49
      %s52 = sphi 0, %s51
      %s66 = sphi 0, %s52
      %s70 = sphi 0, %s70
      %s72 = sphi 0, %s70
      %s73 = sphi 0, %s72
      %s87 = sphi 0, %s73
      %s93 = sphi 0, %s95
      %s96 = sphi 0, %s93
      %s97 = sphi 0, %s96
      %s113 = sphi 0, %s97
    $region4: #{tpu_custom_call.1} parent=1 // loop_header_branch
      %18 = sbr.rel (%p16) target = $region8
    $region5: #{tpu_custom_call.1} parent=1 // loop_body
      %s20 = ssub.s32 %s15, 1
      %s21 = ssub.s32 %s15, 2
      %s22 = sadd.s32 %s15, 1
      %s23 = ssub.s32 %s15, %s22
      %p24 = scmp.eq.s32.totalorder %s23, 0
      %s26 = sadd.s32 %s25, 1
      %s27 = scalar_select %p24, %s25, %s26
      %p30 = pneg %p24
      %p31 = scmp.eq.s32.totalorder %s15, 3
      %p32 = por %p30, %p31
      %p33 = scmp.ne.s32.totalorder %s25, %s28
      %p34 = scmp.eq.s32.totalorder %s15, 0
      %p35 = por %p33, %p34
      %p36 = scmp.ne.s32.totalorder %s25, %s28
      %p37 = scmp.eq.s32.totalorder %s20, 3
      %p38 = por %p36, %p37
      %p39 = scmp.ne.s32.totalorder %s28, %s29
      %p40 = scmp.eq.s32.totalorder %s20, 0
      %p41 = por %p39, %p40
      %p42 = scmp.ne.s32.totalorder %s28, %s29
      %p43 = scmp.eq.s32.totalorder %s21, 3
      %p44 = por %p42, %p43
      %p46 = scmp.ne.s32.totalorder %s29, %s45
      %p47 = scmp.eq.s32.totalorder %s21, 0
      %p48 = por %p46, %p47
      %s50 = sadd.s32 %s49, 1
      %p53 = scmp.eq.s32.totalorder %s15, 3
      %p54 = scmp.ne.s32.totalorder %s49, %s51
      %p55 = scmp.eq.s32.totalorder %s15, 0
      %p56 = por %p54, %p55
      %p57 = scmp.ne.s32.totalorder %s49, %s51
      %p58 = scmp.eq.s32.totalorder %s20, 3
      %p59 = por %p57, %p58
      %p60 = scmp.ne.s32.totalorder %s51, %s52
      %p61 = scmp.eq.s32.totalorder %s20, 0
      %p62 = por %p60, %p61
      %p63 = scmp.ne.s32.totalorder %s51, %s52
      %p64 = scmp.eq.s32.totalorder %s21, 3
      %p65 = por %p63, %p64
      %p67 = scmp.ne.s32.totalorder %s52, %s66
      %p68 = scmp.eq.s32.totalorder %s21, 0
      %p69 = por %p67, %p68
      %s71 = sadd.s32 %s70, 1
      %p74 = scmp.eq.s32.totalorder %s15, 3
      %p75 = scmp.ne.s32.totalorder %s70, %s72
      %p76 = scmp.eq.s32.totalorder %s15, 0
      %p77 = por %p75, %p76
      %p78 = scmp.ne.s32.totalorder %s70, %s72
      %p79 = scmp.eq.s32.totalorder %s20, 3
      %p80 = por %p78, %p79
      %p81 = scmp.ne.s32.totalorder %s72, %s73
      %p82 = scmp.eq.s32.totalorder %s20, 0
      %p83 = por %p81, %p82
      %p84 = scmp.ne.s32.totalorder %s72, %s73
      %p85 = scmp.eq.s32.totalorder %s21, 3
      %p86 = por %p84, %p85
      %p88 = scmp.ne.s32.totalorder %s73, %s87
      %p89 = scmp.eq.s32.totalorder %s21, 0
      %p90 = por %p88, %p89
      %s91 = ssub.s32 %s15, %s22
      %p92 = scmp.eq.s32.totalorder %s91, 0
      %s94 = sadd.s32 %s93, 1
      %s95 = scalar_select %p92, %s93, %s94
      %p98 = pneg %p92
      %p99 = scmp.eq.s32.totalorder %s15, 3
      %p100 = por %p98, %p99
      %p101 = scmp.ne.s32.totalorder %s93, %s96
      %p102 = scmp.eq.s32.totalorder %s15, 0
      %p103 = por %p101, %p102
      %p104 = scmp.ne.s32.totalorder %s93, %s96
      %p105 = scmp.eq.s32.totalorder %s20, 3
      %p106 = por %p104, %p105
      %p107 = scmp.ne.s32.totalorder %s96, %s97
      %p108 = scmp.eq.s32.totalorder %s20, 0
      %p109 = por %p107, %p108
      %p110 = scmp.ne.s32.totalorder %s96, %s97
      %p111 = scmp.eq.s32.totalorder %s21, 3
      %p112 = por %p110, %p111
      %p114 = scmp.ne.s32.totalorder %s97, %s113
      %p115 = scmp.eq.s32.totalorder %s21, 0
      %p116 = por %p114, %p115
      %p117 = scmp.le.s32.totalorder 1, %s15
      %p118 = scmp.lt.s32.totalorder %s15, 5
      %p119 = pnand %p117, %p118
      %p120 = pneg %p119
      // Predicated region
      $region9: #{tpu_custom_call.1} parent=5 // pred_check
        _
      $region10: #{tpu_custom_call.1} parent=5 // pred_check_branch
        %122 = sbr.rel (%p119) target = $region12
      $region11: #{tpu_custom_call.1} parent=5 // pred_region
        %s123 = ssub.s32 %s15, 1
        // Predicated region
        $region13: #{tpu_custom_call.1} parent=11 // pred_check
          %p124 = pneg %p62
        $region14: #{tpu_custom_call.1} parent=11 // pred_check_branch
          %126 = sbr.rel (%p124) target = $region16
        $region15: #{tpu_custom_call.1} parent=11 // pred_region
          _
        $region16: #{tpu_custom_call.1} parent=11 // pred_fallthru
          _
        // Predicated region
        $region17: #{tpu_custom_call.1} parent=11 // pred_check
          %p127 = pneg %p83
        $region18: #{tpu_custom_call.1} parent=11 // pred_check_branch
          %129 = sbr.rel (%p127) target = $region20
        $region19: #{tpu_custom_call.1} parent=11 // pred_region
          _
        $region20: #{tpu_custom_call.1} parent=11 // pred_fallthru
          _
      $region12: #{tpu_custom_call.1} parent=5 // pred_fallthru
        _
      %p130 = scmp.lt.s32.totalorder %s15, 4
      // Predicated region
      $region21: #{tpu_custom_call.1} parent=5 // pred_check
        %p131 = pneg %p130
      $region22: #{tpu_custom_call.1} parent=5 // pred_check_branch
        %133 = sbr.rel (%p131) target = $region24
      $region23: #{tpu_custom_call.1} parent=5 // pred_region
        // Predicated region
        $region25: #{tpu_custom_call.1} parent=23 // pred_check
          %p134 = pneg %p35
        $region26: #{tpu_custom_call.1} parent=23 // pred_check_branch
          %136 = sbr.rel (%p134) target = $region28
        $region27: #{tpu_custom_call.1} parent=23 // pred_region
          %s137 = sand.u32 %s25, 1
          %s138 = scalar_lea.sflag [#allocation3], %s137
          %s139 = sand.u32 %s25, 1
          %s140 = smul.addr %s139, 32
          %s141 = scalar_lea.vmem [#allocation2], %s140
          %s142 = smul.u32 2, %s15
          %s144 = ssub.s32 512, 512
          %145 = vsyncadd %s138, %s144
          %s146 = smul.addr %s142, 2
          %s147 = smul.addr %s146, 128
          %s148 = scalar_lea.hbm %s0, %s147
          %s149 = sshll.u32 %s141, 4
          %s150 = int_to_ptr.vmem [resolvable:$true] %s149
          %155 = dma.hbm_to_vmem [thread:$0]  %s148, 512, %s150, %s138, 128, 128, 8
        $region28: #{tpu_custom_call.1} parent=23 // pred_fallthru
          _
      $region24: #{tpu_custom_call.1} parent=5 // pred_fallthru
        _
      %p156 = scmp.le.s32.totalorder 1, %s15
      %p157 = scmp.lt.s32.totalorder %s15, 5
      %p158 = pnand %p156, %p157
      %p159 = pneg %p158
      // Predicated region
      $region29: #{tpu_custom_call.1} parent=5 // pred_check
        _
      $region30: #{tpu_custom_call.1} parent=5 // pred_check_branch
        %161 = sbr.rel (%p158) target = $region32
      $region31: #{tpu_custom_call.1} parent=5 // pred_region
        %s162 = ssub.s32 %s15, 1
        %s163 = sand.u32 %s28, 1
        %s164 = scalar_lea.sflag [#allocation3], %s163
        %s165 = sand.u32 %s28, 1
        %s166 = smul.addr %s165, 32
        %s167 = scalar_lea.vmem [#allocation2], %s166
        // Predicated region
        $region33: #{tpu_custom_call.1} parent=31 // pred_check
          %p168 = pneg %p41
        $region34: #{tpu_custom_call.1} parent=31 // pred_check_branch
          %170 = sbr.rel (%p168) target = $region36
        $region35: #{tpu_custom_call.1} parent=31 // pred_region
          %171 = dma.done %s164, 512
        $region36: #{tpu_custom_call.1} parent=31 // pred_fallthru
          _
        %s172 = sand.u32 %s28, 1
        %s173 = scalar_lea.sflag [#allocation3], %s172
        %s174 = sand.u32 %s28, 1
        %s175 = smul.addr %s174, 32
        %s176 = scalar_lea.vmem [#allocation2], %s175
        %p177 = pneg %p41
        %p178 = pneg %p38
        %p179 = pneg %p62
        %p180 = pneg %p59
        %p181 = pneg %p83
        %p182 = pneg %p80
        %p183 = pneg %p109
        %p184 = pneg %p106
        %s185 = sand.u32 %s96, 1
        %s186 = scalar_lea.sflag [#allocation4], %s185
        %s187 = sand.u32 %s96, 1
        %s188 = smul.addr %s187, 16
        %s189 = scalar_lea.vmem [#allocation5], %s188
        %s190 = smul.u32 2, %s20
        %s191 = smul.u32 2, %s20
        %v192 = vld [vmem:[%s1] sm:$0xff]
        %v193 = vld [vmem:[%s2] sm:$0xff]
        %v194 = vld [vmem:[%s2 + $0x8] sm:$0xff]
        %v195 = vld [vmem:[%s167] sm:$0xff]
        %v196 = vld [vmem:[%s167 + $0x8] sm:$0xff]
        %vm197 = vcmask 130048
        %v199 = vsel %vm197, %v195, 0
        %v202 = vsel %vm197, %v196, 0
        %204 = vmatprep.subr.mxu0 0.0
        %205 = vmatpush1.msra.mxu0 %v193
        %206 = vmatprep.subr.mxu0 0.0
        %207 = vmatpush1.msra.mxu0 %v194
        %208 = vmatprep.subr.mxu0 0.0
        %209 = vmatpush1.msra.mxu0 0.0
        %210 = vmatprep.subr.mxu0 0.0
        %211 = vmatpush1.msra.mxu0 0.0
        %212 = vmatprep.subr.mxu0 0.0
        %213 = vmatpush1.msra.mxu0 0.0
        %214 = vmatprep.subr.mxu0 0.0
        %215 = vmatpush1.msra.mxu0 0.0
        %216 = vmatprep.subr.mxu0 0.0
        %217 = vmatpush1.msra.mxu0 0.0
        %218 = vmatprep.subr.mxu0 0.0
        %219 = vmatpush1.msra.mxu0 0.0
        %220 = vmatprep.subr.mxu0 0.0
        %221 = vmatpush1.msra.mxu0 0.0
        %222 = vmatprep.subr.mxu0 0.0
        %223 = vmatpush1.msra.mxu0 0.0
        %224 = vmatprep.subr.mxu0 0.0
        %225 = vmatpush1.msra.mxu0 0.0
        %226 = vmatprep.subr.mxu0 0.0
        %227 = vmatpush1.msra.mxu0 0.0
        %228 = vmatprep.subr.mxu0 0.0
        %229 = vmatpush1.msra.mxu0 0.0
        %230 = vmatprep.subr.mxu0 0.0
        %231 = vmatpush1.msra.mxu0 0.0
        %232 = vmatprep.subr.mxu0 0.0
        %233 = vmatpush1.msra.mxu0 0.0
        %234 = vmatprep.subr.mxu0 0.0
        %235 = vmatpush1.msra.mxu0 0.0
        %236 = vmatprep.subr.mxu0 0.0
        %237 = vmatpush1.msra.mxu0 0.0
        %238 = vmatprep.subr.mxu0 0.0
        %239 = vmatpush1.msra.mxu0 0.0
        %240 = vmatprep.subr.mxu0 0.0
        %241 = vmatpush1.msra.mxu0 0.0
        %242 = vmatprep.subr.mxu0 0.0
        %243 = vmatpush1.msra.mxu0 0.0
        %244 = vmatprep.subr.mxu0 0.0
        %245 = vmatpush1.msra.mxu0 0.0
        %246 = vmatprep.subr.mxu0 0.0
        %247 = vmatpush1.msra.mxu0 0.0
        %248 = vmatprep.subr.mxu0 0.0
        %249 = vmatpush1.msra.mxu0 0.0
        %250 = vmatprep.subr.mxu0 0.0
        %251 = vmatpush1.msra.mxu0 0.0
        %252 = vmatprep.subr.mxu0 0.0
        %253 = vmatpush1.msra.mxu0 0.0
        %254 = vmatprep.subr.mxu0 0.0
        %255 = vmatpush1.msra.mxu0 0.0
        %256 = vmatprep.subr.mxu0 0.0
        %257 = vmatpush1.msra.mxu0 0.0
        %258 = vmatprep.subr.mxu0 0.0
        %259 = vmatpush1.msra.mxu0 0.0
        %260 = vmatprep.subr.mxu0 0.0
        %261 = vmatpush1.msra.mxu0 0.0
        %262 = vmatprep.subr.mxu0 0.0
        %263 = vmatpush1.msra.mxu0 0.0
        %264 = vmatprep.subr.mxu0 0.0
        %265 = vmatpush1.msra.mxu0 0.0
        %266 = vmatprep.subr.mxu0 0.0
        %267 = vmatpush1.msra.mxu0 0.0
        %268 = vmatprep.mubr.f32.mxu0 0.0
        %269 = vmatmul.mubr.f32.gmra.mrb[0].mxu0 %v199
        %v270 = vpop.f32.mrb[0].mxu0
        %v271 = vadd.f32 0.0, %v270
        %v272 = vpop.f32.mrb[0].mxu0
        %273 = vmatprep.mubr.f32.mxu0 0.0
        %274 = vmatmul.mubr.f32.gmra.mrb[0].mxu0 %v202
        %v275 = vpop.f32.mrb[0].mxu0
        %v276 = vadd.f32 0.0, %v275
        %v277 = vpop.f32.mrb[0].mxu0
        %278 = vdwg.mxu0
        %v280 = vsel %vm197, %v192, 0
        %282 = vmatprep.subr.mxu0 0.0
        %283 = vmatpush1.msra.mxu0 %v271
        %284 = vmatprep.subr.mxu0 0.0
        %285 = vmatpush1.msra.mxu0 %v276
        %286 = vmatprep.subr.mxu0 0.0
        %287 = vmatpush1.msra.mxu0 0.0
        %288 = vmatprep.subr.mxu0 0.0
        %289 = vmatpush1.msra.mxu0 0.0
        %290 = vmatprep.subr.mxu0 0.0
        %291 = vmatpush1.msra.mxu0 0.0
        %292 = vmatprep.subr.mxu0 0.0
        %293 = vmatpush1.msra.mxu0 0.0
        %294 = vmatprep.subr.mxu0 0.0
        %295 = vmatpush1.msra.mxu0 0.0
        %296 = vmatprep.subr.mxu0 0.0
        %297 = vmatpush1.msra.mxu0 0.0
        %298 = vmatprep.subr.mxu0 0.0
        %299 = vmatpush1.msra.mxu0 0.0
        %300 = vmatprep.subr.mxu0 0.0
        %301 = vmatpush1.msra.mxu0 0.0
        %302 = vmatprep.subr.mxu0 0.0
        %303 = vmatpush1.msra.mxu0 0.0
        %304 = vmatprep.subr.mxu0 0.0
        %305 = vmatpush1.msra.mxu0 0.0
        %306 = vmatprep.subr.mxu0 0.0
        %307 = vmatpush1.msra.mxu0 0.0
        %308 = vmatprep.subr.mxu0 0.0
        %309 = vmatpush1.msra.mxu0 0.0
        %310 = vmatprep.subr.mxu0 0.0
        %311 = vmatpush1.msra.mxu0 0.0
        %312 = vmatprep.subr.mxu0 0.0
        %313 = vmatpush1.msra.mxu0 0.0
        %314 = vmatprep.subr.mxu0 0.0
        %315 = vmatpush1.msra.mxu0 0.0
        %316 = vmatprep.subr.mxu0 0.0
        %317 = vmatpush1.msra.mxu0 0.0
        %318 = vmatprep.subr.mxu0 0.0
        %319 = vmatpush1.msra.mxu0 0.0
        %320 = vmatprep.subr.mxu0 0.0
        %321 = vmatpush1.msra.mxu0 0.0
        %322 = vmatprep.subr.mxu0 0.0
        %323 = vmatpush1.msra.mxu0 0.0
        %324 = vmatprep.subr.mxu0 0.0
        %325 = vmatpush1.msra.mxu0 0.0
        %326 = vmatprep.subr.mxu0 0.0
        %327 = vmatpush1.msra.mxu0 0.0
        %328 = vmatprep.subr.mxu0 0.0
        %329 = vmatpush1.msra.mxu0 0.0
        %330 = vmatprep.subr.mxu0 0.0
        %331 = vmatpush1.msra.mxu0 0.0
        %332 = vmatprep.subr.mxu0 0.0
        %333 = vmatpush1.msra.mxu0 0.0
        %334 = vmatprep.subr.mxu0 0.0
        %335 = vmatpush1.msra.mxu0 0.0
        %336 = vmatprep.subr.mxu0 0.0
        %337 = vmatpush1.msra.mxu0 0.0
        %338 = vmatprep.subr.mxu0 0.0
        %339 = vmatpush1.msra.mxu0 0.0
        %340 = vmatprep.subr.mxu0 0.0
        %341 = vmatpush1.msra.mxu0 0.0
        %342 = vmatprep.subr.mxu0 0.0
        %343 = vmatpush1.msra.mxu0 0.0
        %344 = vmatprep.subr.mxu0 0.0
        %345 = vmatpush1.msra.mxu0 0.0
        %346 = vmatprep.mubr.f32.mxu0 0.0
        %347 = vmatmul.mubr.f32.gmra.mrb[0].mxu0 %v280
        %v348 = vpop.f32.mrb[0].mxu0
        %v349 = vadd.f32 0.0, %v348
        %v350 = vpop.f32.mrb[0].mxu0
        %351 = vdwg.mxu0
        %vm352 = vcmask 64512
        %353 = vst.msk [vmem:[%s189] sm:$0xff] %vm352, %v349
        %s354 = scalar_lea.vmem %s167, 16 [#allocation2]
        %v355 = vld [vmem:[%s354] sm:$0xff]
        %v356 = vld [vmem:[%s354 + $0x8] sm:$0xff]
        %v358 = vsel %vm197, %v355, 0
        %v361 = vsel %vm197, %v356, 0
        %363 = vmatprep.subr.mxu0 0.0
        %364 = vmatpush1.msra.mxu0 %v193
        %365 = vmatprep.subr.mxu0 0.0
        %366 = vmatpush1.msra.mxu0 %v194
        %367 = vmatprep.subr.mxu0 0.0
        %368 = vmatpush1.msra.mxu0 0.0
        %369 = vmatprep.subr.mxu0 0.0
        %370 = vmatpush1.msra.mxu0 0.0
        %371 = vmatprep.subr.mxu0 0.0
        %372 = vmatpush1.msra.mxu0 0.0
        %373 = vmatprep.subr.mxu0 0.0
        %374 = vmatpush1.msra.mxu0 0.0
        %375 = vmatprep.subr.mxu0 0.0
        %376 = vmatpush1.msra.mxu0 0.0
        %377 = vmatprep.subr.mxu0 0.0
        %378 = vmatpush1.msra.mxu0 0.0
        %379 = vmatprep.subr.mxu0 0.0
        %380 = vmatpush1.msra.mxu0 0.0
        %381 = vmatprep.subr.mxu0 0.0
        %382 = vmatpush1.msra.mxu0 0.0
        %383 = vmatprep.subr.mxu0 0.0
        %384 = vmatpush1.msra.mxu0 0.0
        %385 = vmatprep.subr.mxu0 0.0
        %386 = vmatpush1.msra.mxu0 0.0
        %387 = vmatprep.subr.mxu0 0.0
        %388 = vmatpush1.msra.mxu0 0.0
        %389 = vmatprep.subr.mxu0 0.0
        %390 = vmatpush1.msra.mxu0 0.0
        %391 = vmatprep.subr.mxu0 0.0
        %392 = vmatpush1.msra.mxu0 0.0
        %393 = vmatprep.subr.mxu0 0.0
        %394 = vmatpush1.msra.mxu0 0.0
        %395 = vmatprep.subr.mxu0 0.0
        %396 = vmatpush1.msra.mxu0 0.0
        %397 = vmatprep.subr.mxu0 0.0
        %398 = vmatpush1.msra.mxu0 0.0
        %399 = vmatprep.subr.mxu0 0.0
        %400 = vmatpush1.msra.mxu0 0.0
        %401 = vmatprep.subr.mxu0 0.0
        %402 = vmatpush1.msra.mxu0 0.0
        %403 = vmatprep.subr.mxu0 0.0
        %404 = vmatpush1.msra.mxu0 0.0
        %405 = vmatprep.subr.mxu0 0.0
        %406 = vmatpush1.msra.mxu0 0.0
        %407 = vmatprep.subr.mxu0 0.0
        %408 = vmatpush1.msra.mxu0 0.0
        %409 = vmatprep.subr.mxu0 0.0
        %410 = vmatpush1.msra.mxu0 0.0
        %411 = vmatprep.subr.mxu0 0.0
        %412 = vmatpush1.msra.mxu0 0.0
        %413 = vmatprep.subr.mxu0 0.0
        %414 = vmatpush1.msra.mxu0 0.0
        %415 = vmatprep.subr.mxu0 0.0
        %416 = vmatpush1.msra.mxu0 0.0
        %417 = vmatprep.subr.mxu0 0.0
        %418 = vmatpush1.msra.mxu0 0.0
        %419 = vmatprep.subr.mxu0 0.0
        %420 = vmatpush1.msra.mxu0 0.0
        %421 = vmatprep.subr.mxu0 0.0
        %422 = vmatpush1.msra.mxu0 0.0
        %423 = vmatprep.subr.mxu0 0.0
        %424 = vmatpush1.msra.mxu0 0.0
        %425 = vmatprep.subr.mxu0 0.0
        %426 = vmatpush1.msra.mxu0 0.0
        %427 = vmatprep.mubr.f32.mxu0 0.0
        %428 = vmatmul.mubr.f32.gmra.mrb[0].mxu0 %v358
        %v429 = vpop.f32.mrb[0].mxu0
        %v430 = vadd.f32 0.0, %v429
        %v431 = vpop.f32.mrb[0].mxu0
        %432 = vmatprep.mubr.f32.mxu0 0.0
        %433 = vmatmul.mubr.f32.gmra.mrb[0].mxu0 %v361
        %v434 = vpop.f32.mrb[0].mxu0
        %v435 = vadd.f32 0.0, %v434
        %v436 = vpop.f32.mrb[0].mxu0
        %437 = vdwg.mxu0
        %438 = vmatprep.subr.mxu0 0.0
        %439 = vmatpush1.msra.mxu0 %v430
        %440 = vmatprep.subr.mxu0 0.0
        %441 = vmatpush1.msra.mxu0 %v435
        %442 = vmatprep.subr.mxu0 0.0
        %443 = vmatpush1.msra.mxu0 0.0
        %444 = vmatprep.subr.mxu0 0.0
        %445 = vmatpush1.msra.mxu0 0.0
        %446 = vmatprep.subr.mxu0 0.0
        %447 = vmatpush1.msra.mxu0 0.0
        %448 = vmatprep.subr.mxu0 0.0
        %449 = vmatpush1.msra.mxu0 0.0
        %450 = vmatprep.subr.mxu0 0.0
        %451 = vmatpush1.msra.mxu0 0.0
        %452 = vmatprep.subr.mxu0 0.0
        %453 = vmatpush1.msra.mxu0 0.0
        %454 = vmatprep.subr.mxu0 0.0
        %455 = vmatpush1.msra.mxu0 0.0
        %456 = vmatprep.subr.mxu0 0.0
        %457 = vmatpush1.msra.mxu0 0.0
        %458 = vmatprep.subr.mxu0 0.0
        %459 = vmatpush1.msra.mxu0 0.0
        %460 = vmatprep.subr.mxu0 0.0
        %461 = vmatpush1.msra.mxu0 0.0
        %462 = vmatprep.subr.mxu0 0.0
        %463 = vmatpush1.msra.mxu0 0.0
        %464 = vmatprep.subr.mxu0 0.0
        %465 = vmatpush1.msra.mxu0 0.0
        %466 = vmatprep.subr.mxu0 0.0
        %467 = vmatpush1.msra.mxu0 0.0
        %468 = vmatprep.subr.mxu0 0.0
        %469 = vmatpush1.msra.mxu0 0.0
        %470 = vmatprep.subr.mxu0 0.0
        %471 = vmatpush1.msra.mxu0 0.0
        %472 = vmatprep.subr.mxu0 0.0
        %473 = vmatpush1.msra.mxu0 0.0
        %474 = vmatprep.subr.mxu0 0.0
        %475 = vmatpush1.msra.mxu0 0.0
        %476 = vmatprep.subr.mxu0 0.0
        %477 = vmatpush1.msra.mxu0 0.0
        %478 = vmatprep.subr.mxu0 0.0
        %479 = vmatpush1.msra.mxu0 0.0
        %480 = vmatprep.subr.mxu0 0.0
        %481 = vmatpush1.msra.mxu0 0.0
        %482 = vmatprep.subr.mxu0 0.0
        %483 = vmatpush1.msra.mxu0 0.0
        %484 = vmatprep.subr.mxu0 0.0
        %485 = vmatpush1.msra.mxu0 0.0
        %486 = vmatprep.subr.mxu0 0.0
        %487 = vmatpush1.msra.mxu0 0.0
        %488 = vmatprep.subr.mxu0 0.0
        %489 = vmatpush1.msra.mxu0 0.0
        %490 = vmatprep.subr.mxu0 0.0
        %491 = vmatpush1.msra.mxu0 0.0
        %492 = vmatprep.subr.mxu0 0.0
        %493 = vmatpush1.msra.mxu0 0.0
        %494 = vmatprep.subr.mxu0 0.0
        %495 = vmatpush1.msra.mxu0 0.0
        %496 = vmatprep.subr.mxu0 0.0
        %497 = vmatpush1.msra.mxu0 0.0
        %498 = vmatprep.subr.mxu0 0.0
        %499 = vmatpush1.msra.mxu0 0.0
        %500 = vmatprep.subr.mxu0 0.0
        %501 = vmatpush1.msra.mxu0 0.0
        %502 = vmatprep.mubr.f32.mxu0 0.0
        %503 = vmatmul.mubr.f32.gmra.mrb[0].mxu0 %v280
        %v504 = vpop.f32.mrb[0].mxu0
        %v505 = vadd.f32 0.0, %v504
        %v506 = vpop.f32.mrb[0].mxu0
        %507 = vdwg.mxu0
        %s508 = scalar_lea.vmem %s189, 8 [#allocation5]
        %509 = vst.msk [vmem:[%s508] sm:$0xff] %vm352, %v505
        %s510 = sand.u32 %s96, 1
        %s511 = scalar_lea.sflag [#allocation4], %s510
        %s512 = sand.u32 %s96, 1
        %s513 = smul.addr %s512, 16
        %s514 = scalar_lea.vmem [#allocation5], %s513
        // Predicated region
        $region37: #{tpu_custom_call.1} parent=31 // pred_check
          %p515 = pneg %p106
        $region38: #{tpu_custom_call.1} parent=31 // pred_check_branch
          %517 = sbr.rel (%p515) target = $region40
        $region39: #{tpu_custom_call.1} parent=31 // pred_region
          %s518 = smul.u32 2, %s20
          %s520 = ssub.s32 256, 256
          %521 = vsyncadd %s511, %s520
          %s522 = smul.addr %s518, 128
          %s523 = scalar_lea.hbm %s3, %s522
          %s524 = sshll.u32 %s514, 4
          %s525 = int_to_ptr.vmem [resolvable:$true] %s524
          %530 = dma.vmem_to_hbm [thread:$0]  %s525, 256, %s523, %s511, 128, 128, 8
        $region40: #{tpu_custom_call.1} parent=31 // pred_fallthru
          _
      $region32: #{tpu_custom_call.1} parent=5 // pred_fallthru
        _
      %p531 = scmp.le.s32.totalorder 2, %s15
      // Predicated region
      $region41: #{tpu_custom_call.1} parent=5 // pred_check
        %p532 = pneg %p531
      $region42: #{tpu_custom_call.1} parent=5 // pred_check_branch
        %534 = sbr.rel (%p532) target = $region44
      $region43: #{tpu_custom_call.1} parent=5 // pred_region
        %s535 = ssub.s32 %s15, 2
        // Predicated region
        $region45: #{tpu_custom_call.1} parent=43 // pred_check
          %p536 = pneg %p112
        $region46: #{tpu_custom_call.1} parent=43 // pred_check_branch
          %538 = sbr.rel (%p536) target = $region48
        $region47: #{tpu_custom_call.1} parent=43 // pred_region
          %s539 = sand.u32 %s97, 1
          %s540 = scalar_lea.sflag [#allocation4], %s539
          %s541 = sand.u32 %s97, 1
          %s542 = smul.addr %s541, 16
          %s543 = scalar_lea.vmem [#allocation5], %s542
          %544 = dma.done %s540, 256
        $region48: #{tpu_custom_call.1} parent=43 // pred_fallthru
          _
      $region44: #{tpu_custom_call.1} parent=5 // pred_fallthru
        _
    $region6: #{tpu_custom_call.1} parent=1 // loop_footer
      %s19 = sadd.s32 1, %s15
    $region7: #{tpu_custom_call.1} parent=1 // loop_footer_branch
      %14 = sbr.rel target = $region3
    $region8: #{tpu_custom_call.1} parent=1 // loop_exit
      _
    %545 = vsyncpa [#allocation3], 1
    %s546 = scalar_lea.sflag [#allocation3], 1
    %547 = vsyncpa %s546, 1
    %548 = vsyncpa [#allocation4], 1
    %s549 = scalar_lea.sflag [#allocation4], 1
    %550 = vsyncpa %s549, 1

// kernel: tpu_custom_call.1
$region0: #{tpu_custom_call.1}
  #allocation0 [shape = 'u32[]', space=smem, size = 0x4, offset = 0x4, fixed_abs, tag = 'smem constant byte address 0x4 - core index']
  #allocation1 [shape = 'u32[144,128]{1,0:T(1,128)}', space=vmem, size = 0x12000, scoped, tag = 'internal scratch']
  %s0 = inlined_call_operand.hbm [shape: f32[8,16,16], index: 0, kind: input, shape index: {}]
  %s1 = inlined_call_operand.vmem [shape: f32[8,16], index: 1, kind: input, shape index: {}]
  %s2 = inlined_call_operand.vmem [shape: f32[16,8], index: 2, kind: input, shape index: {}]
  %s3 = inlined_call_operand.hbm [shape: f32[8,8,8], index: 3, kind: output, shape index: {}]
  %s4 = sld [smem:[#allocation0]]
  $region49: #{tpu_custom_call.1} parent=0
    _
  %s6 = ssub.s32 1, %s4
  %s7 = scalar_select 0, %s6, %s4
  $region1: #{tpu_custom_call.1} parent=0
    #allocation2 [shape = 'u8[32768]{0}', space=vmem, size = 0x8000, scoped, tag = 'input window, operand 0']
    #allocation3 [shape = 's32[2]{0}', space=sflag, size = 0x8, scoped, tag = 'scoped memory for tpu_custom_call.1']
    #allocation4 [shape = 's32[2]{0}', space=sflag, size = 0x8, scoped, tag = 'scoped memory for tpu_custom_call.1']
    #allocation5 [shape = 'u8[16384]{0}', space=vmem, size = 0x4000, scoped, tag = 'output window, operand 0']
    %8 = vsyncpa [#allocation3], 0
    %s9 = scalar_lea.sflag [#allocation3], 1
    %10 = vsyncpa %s9, 0
    %11 = vsyncpa [#allocation4], 0
    %s12 = scalar_lea.sflag [#allocation4], 1
    %13 = vsyncpa %s12, 0
    loop: start=0, step=1, limit=6
    $region2: #{tpu_custom_call.1} parent=1 // loop_pre_header
      _
    $region3: #{tpu_custom_call.1} parent=1 // loop_header
      %s15 = sphi 0, %s19
      %p16 = scmp.ge.s32.totalorder %s15, 6
      %s25 = sphi 0, %s27
      %s28 = sphi 0, %s25
      %s29 = sphi 0, %s28
      %s45 = sphi 0, %s29
      %s49 = sphi 0, %s49
      %s51 = sphi 0, %s49
      %s52 = sphi 0, %s51
      %s66 = sphi 0, %s52
      %s70 = sphi 0, %s70
      %s72 = sphi 0, %s70
      %s73 = sphi 0, %s72
      %s87 = sphi 0, %s73
      %s93 = sphi 0, %s95
      %s96 = sphi 0, %s93
      %s97 = sphi 0, %s96
      %s113 = sphi 0, %s97
    $region4: #{tpu_custom_call.1} parent=1 // loop_header_branch
      %18 = sbr.rel (%p16) target = $region8
    $region5: #{tpu_custom_call.1} parent=1 // loop_body
      %s20 = ssub.s32 %s15, 1
      %s21 = ssub.s32 %s15, 2
      %s22 = sadd.s32 %s15, 1
      %s23 = ssub.s32 %s15, %s22
      %p24 = scmp.eq.s32.totalorder %s23, 0
      %s26 = sadd.s32 %s25, 1
      %s27 = scalar_select %p24, %s25, %s26
      %p30 = pneg %p24
      %p31 = scmp.eq.s32.totalorder %s15, 3
      %p32 = por %p30, %p31
      %p33 = scmp.ne.s32.totalorder %s25, %s28
      %p34 = scmp.eq.s32.totalorder %s15, 0
      %p35 = por %p33, %p34
      %p36 = scmp.ne.s32.totalorder %s25, %s28
      %p37 = scmp.eq.s32.totalorder %s20, 3
      %p38 = por %p36, %p37
      %p39 = scmp.ne.s32.totalorder %s28, %s29
      %p40 = scmp.eq.s32.totalorder %s20, 0
      %p41 = por %p39, %p40
      %p42 = scmp.ne.s32.totalorder %s28, %s29
      %p43 = scmp.eq.s32.totalorder %s21, 3
      %p44 = por %p42, %p43
      %p46 = scmp.ne.s32.totalorder %s29, %s45
      %p47 = scmp.eq.s32.totalorder %s21, 0
      %p48 = por %p46, %p47
      %s50 = sadd.s32 %s49, 1
      %p53 = scmp.eq.s32.totalorder %s15, 3
      %p54 = scmp.ne.s32.totalorder %s49, %s51
      %p55 = scmp.eq.s32.totalorder %s15, 0
      %p56 = por %p54, %p55
      %p57 = scmp.ne.s32.totalorder %s49, %s51
      %p58 = scmp.eq.s32.totalorder %s20, 3
      %p59 = por %p57, %p58
      %p60 = scmp.ne.s32.totalorder %s51, %s52
      %p61 = scmp.eq.s32.totalorder %s20, 0
      %p62 = por %p60, %p61
      %p63 = scmp.ne.s32.totalorder %s51, %s52
      %p64 = scmp.eq.s32.totalorder %s21, 3
      %p65 = por %p63, %p64
      %p67 = scmp.ne.s32.totalorder %s52, %s66
      %p68 = scmp.eq.s32.totalorder %s21, 0
      %p69 = por %p67, %p68
      %s71 = sadd.s32 %s70, 1
      %p74 = scmp.eq.s32.totalorder %s15, 3
      %p75 = scmp.ne.s32.totalorder %s70, %s72
      %p76 = scmp.eq.s32.totalorder %s15, 0
      %p77 = por %p75, %p76
      %p78 = scmp.ne.s32.totalorder %s70, %s72
      %p79 = scmp.eq.s32.totalorder %s20, 3
      %p80 = por %p78, %p79
      %p81 = scmp.ne.s32.totalorder %s72, %s73
      %p82 = scmp.eq.s32.totalorder %s20, 0
      %p83 = por %p81, %p82
      %p84 = scmp.ne.s32.totalorder %s72, %s73
      %p85 = scmp.eq.s32.totalorder %s21, 3
      %p86 = por %p84, %p85
      %p88 = scmp.ne.s32.totalorder %s73, %s87
      %p89 = scmp.eq.s32.totalorder %s21, 0
      %p90 = por %p88, %p89
      %s91 = ssub.s32 %s15, %s22
      %p92 = scmp.eq.s32.totalorder %s91, 0
      %s94 = sadd.s32 %s93, 1
      %s95 = scalar_select %p92, %s93, %s94
      %p98 = pneg %p92
      %p99 = scmp.eq.s32.totalorder %s15, 3
      %p100 = por %p98, %p99
      %p101 = scmp.ne.s32.totalorder %s93, %s96
      %p102 = scmp.eq.s32.totalorder %s15, 0
      %p103 = por %p101, %p102
      %p104 = scmp.ne.s32.totalorder %s93, %s96
      %p105 = scmp.eq.s32.totalorder %s20, 3
      %p106 = por %p104, %p105
      %p107 = scmp.ne.s32.totalorder %s96, %s97
      %p108 = scmp.eq.s32.totalorder %s20, 0
      %p109 = por %p107, %p108
      %p110 = scmp.ne.s32.totalorder %s96, %s97
      %p111 = scmp.eq.s32.totalorder %s21, 3
      %p112 = por %p110, %p111
      %p114 = scmp.ne.s32.totalorder %s97, %s113
      %p115 = scmp.eq.s32.totalorder %s21, 0
      %p116 = por %p114, %p115
      %p117 = scmp.le.s32.totalorder 1, %s15
      %p118 = scmp.lt.s32.totalorder %s15, 5
      %p119 = pnand %p117, %p118
      %p120 = pneg %p119
      // Predicated region
      $region9: #{tpu_custom_call.1} parent=5 // pred_check
        _
      $region10: #{tpu_custom_call.1} parent=5 // pred_check_branch
        %122 = sbr.rel (%p119) target = $region12
      $region11: #{tpu_custom_call.1} parent=5 // pred_region
        %s123 = ssub.s32 %s15, 1
        // Predicated region
        $region13: #{tpu_custom_call.1} parent=11 // pred_check
          %p124 = pneg %p62
        $region14: #{tpu_custom_call.1} parent=11 // pred_check_branch
          %126 = sbr.rel (%p124) target = $region16
        $region15: #{tpu_custom_call.1} parent=11 // pred_region
          _
        $region16: #{tpu_custom_call.1} parent=11 // pred_fallthru
          _
        // Predicated region
        $region17: #{tpu_custom_call.1} parent=11 // pred_check
          %p127 = pneg %p83
        $region18: #{tpu_custom_call.1} parent=11 // pred_check_branch
          %129 = sbr.rel (%p127) target = $region20
        $region19: #{tpu_custom_call.1} parent=11 // pred_region
          _
        $region20: #{tpu_custom_call.1} parent=11 // pred_fallthru
          _
      $region12: #{tpu_custom_call.1} parent=5 // pred_fallthru
        _
      %p130 = scmp.lt.s32.totalorder %s15, 4
      // Predicated region
      $region21: #{tpu_custom_call.1} parent=5 // pred_check
        %p131 = pneg %p130
      $region22: #{tpu_custom_call.1} parent=5 // pred_check_branch
        %133 = sbr.rel (%p131) target = $region24
      $region23: #{tpu_custom_call.1} parent=5 // pred_region
        // Predicated region
        $region25: #{tpu_custom_call.1} parent=23 // pred_check
          %p134 = pneg %p35
        $region26: #{tpu_custom_call.1} parent=23 // pred_check_branch
          %136 = sbr.rel (%p134) target = $region28
        $region27: #{tpu_custom_call.1} parent=23 // pred_region
          %s137 = sand.u32 %s25, 1
          %s138 = scalar_lea.sflag [#allocation3], %s137
          %s139 = sand.u32 %s25, 1
          %s140 = smul.addr %s139, 32
          %s141 = scalar_lea.vmem [#allocation2], %s140
          %s142 = smul.u32 2, %s15
          %s144 = ssub.s32 512, 512
          %145 = vsyncadd %s138, %s144
          %s146 = smul.addr %s142, 2
          %s147 = smul.addr %s146, 128
          %s148 = scalar_lea.hbm %s0, %s147
          %s149 = sshll.u32 %s141, 4
          %s150 = int_to_ptr.vmem [resolvable:$true] %s149
          %155 = dma.hbm_to_vmem [thread:$0]  %s148, 512, %s150, %s138, 128, 128, 8
        $region28: #{tpu_custom_call.1} parent=23 // pred_fallthru
          _
      $region24: #{tpu_custom_call.1} parent=5 // pred_fallthru
        _
      %p156 = scmp.le.s32.totalorder 1, %s15
      %p157 = scmp.lt.s32.totalorder %s15, 5
      %p158 = pnand %p156, %p157
      %p159 = pneg %p158
      // Predicated region
      $region29: #{tpu_custom_call.1} parent=5 // pred_check
        _
      $region30: #{tpu_custom_call.1} parent=5 // pred_check_branch
        %161 = sbr.rel (%p158) target = $region32
      $region31: #{tpu_custom_call.1} parent=5 // pred_region
        %s162 = ssub.s32 %s15, 1
        %s163 = sand.u32 %s28, 1
        %s164 = scalar_lea.sflag [#allocation3], %s163
        %s165 = sand.u32 %s28, 1
        %s166 = smul.addr %s165, 32
        %s167 = scalar_lea.vmem [#allocation2], %s166
        // Predicated region
        $region33: #{tpu_custom_call.1} parent=31 // pred_check
          %p168 = pneg %p41
        $region34: #{tpu_custom_call.1} parent=31 // pred_check_branch
          %170 = sbr.rel (%p168) target = $region36
        $region35: #{tpu_custom_call.1} parent=31 // pred_region
          %171 = dma.done %s164, 512
        $region36: #{tpu_custom_call.1} parent=31 // pred_fallthru
          _
        %s172 = sand.u32 %s28, 1
        %s173 = scalar_lea.sflag [#allocation3], %s172
        %s174 = sand.u32 %s28, 1
        %s175 = smul.addr %s174, 32
        %s176 = scalar_lea.vmem [#allocation2], %s175
        %p177 = pneg %p41
        %p178 = pneg %p38
        %p179 = pneg %p62
        %p180 = pneg %p59
        %p181 = pneg %p83
        %p182 = pneg %p80
        %p183 = pneg %p109
        %p184 = pneg %p106
        %s185 = sand.u32 %s96, 1
        %s186 = scalar_lea.sflag [#allocation4], %s185
        %s187 = sand.u32 %s96, 1
        %s188 = smul.addr %s187, 16
        %s189 = scalar_lea.vmem [#allocation5], %s188
        %s190 = smul.u32 2, %s20
        %s191 = smul.u32 2, %s20
        %v192 = vld [vmem:[%s1] sm:$0xff]
        %v193 = vld [vmem:[%s2] sm:$0xff]
        %v194 = vld [vmem:[%s2 + $0x8] sm:$0xff]
        %v195 = vld [vmem:[%s167] sm:$0xff]
        %v196 = vld [vmem:[%s167 + $0x8] sm:$0xff]
        %vm197 = vcmask 130048
        %v199 = vsel %vm197, %v195, 0
        %v202 = vsel %vm197, %v196, 0
        %204 = vmatprep.subr.mxu0 0.0
        %205 = vmatpush1.msra.mxu0 %v193
        %206 = vmatprep.subr.mxu0 0.0
        %207 = vmatpush1.msra.mxu0 %v194
        %208 = vmatprep.subr.mxu0 0.0
        %209 = vmatpush1.msra.mxu0 0.0
        %210 = vmatprep.subr.mxu0 0.0
        %211 = vmatpush1.msra.mxu0 0.0
        %212 = vmatprep.subr.mxu0 0.0
        %213 = vmatpush1.msra.mxu0 0.0
        %214 = vmatprep.subr.mxu0 0.0
        %215 = vmatpush1.msra.mxu0 0.0
        %216 = vmatprep.subr.mxu0 0.0
        %217 = vmatpush1.msra.mxu0 0.0
        %218 = vmatprep.subr.mxu0 0.0
        %219 = vmatpush1.msra.mxu0 0.0
        %220 = vmatprep.subr.mxu0 0.0
        %221 = vmatpush1.msra.mxu0 0.0
        %222 = vmatprep.subr.mxu0 0.0
        %223 = vmatpush1.msra.mxu0 0.0
        %224 = vmatprep.subr.mxu0 0.0
        %225 = vmatpush1.msra.mxu0 0.0
        %226 = vmatprep.subr.mxu0 0.0
        %227 = vmatpush1.msra.mxu0 0.0
        %228 = vmatprep.subr.mxu0 0.0
        %229 = vmatpush1.msra.mxu0 0.0
        %230 = vmatprep.subr.mxu0 0.0
        %231 = vmatpush1.msra.mxu0 0.0
        %232 = vmatprep.subr.mxu0 0.0
        %233 = vmatpush1.msra.mxu0 0.0
        %234 = vmatprep.subr.mxu0 0.0
        %235 = vmatpush1.msra.mxu0 0.0
        %236 = vmatprep.subr.mxu0 0.0
        %237 = vmatpush1.msra.mxu0 0.0
        %238 = vmatprep.subr.mxu0 0.0
        %239 = vmatpush1.msra.mxu0 0.0
        %240 = vmatprep.subr.mxu0 0.0
        %241 = vmatpush1.msra.mxu0 0.0
        %242 = vmatprep.subr.mxu0 0.0
        %243 = vmatpush1.msra.mxu0 0.0
        %244 = vmatprep.subr.mxu0 0.0
        %245 = vmatpush1.msra.mxu0 0.0
        %246 = vmatprep.subr.mxu0 0.0
        %247 = vmatpush1.msra.mxu0 0.0
        %248 = vmatprep.subr.mxu0 0.0
        %249 = vmatpush1.msra.mxu0 0.0
        %250 = vmatprep.subr.mxu0 0.0
        %251 = vmatpush1.msra.mxu0 0.0
        %252 = vmatprep.subr.mxu0 0.0
        %253 = vmatpush1.msra.mxu0 0.0
        %254 = vmatprep.subr.mxu0 0.0
        %255 = vmatpush1.msra.mxu0 0.0
        %256 = vmatprep.subr.mxu0 0.0
        %257 = vmatpush1.msra.mxu0 0.0
        %258 = vmatprep.subr.mxu0 0.0
        %259 = vmatpush1.msra.mxu0 0.0
        %260 = vmatprep.subr.mxu0 0.0
        %261 = vmatpush1.msra.mxu0 0.0
        %262 = vmatprep.subr.mxu0 0.0
        %263 = vmatpush1.msra.mxu0 0.0
        %264 = vmatprep.subr.mxu0 0.0
        %265 = vmatpush1.msra.mxu0 0.0
        %266 = vmatprep.subr.mxu0 0.0
        %267 = vmatpush1.msra.mxu0 0.0
        %268 = vmatprep.mubr.f32.mxu0 0.0
        %269 = vmatmul.mubr.f32.gmra.mrb[0].mxu0 %v199
        %v270 = vpop.f32.mrb[0].mxu0
        %v271 = vadd.f32 0.0, %v270
        %v272 = vpop.f32.mrb[0].mxu0
        %273 = vmatprep.mubr.f32.mxu0 0.0
        %274 = vmatmul.mubr.f32.gmra.mrb[0].mxu0 %v202
        %v275 = vpop.f32.mrb[0].mxu0
        %v276 = vadd.f32 0.0, %v275
        %v277 = vpop.f32.mrb[0].mxu0
        %278 = vdwg.mxu0
        %v280 = vsel %vm197, %v192, 0
        %282 = vmatprep.subr.mxu0 0.0
        %283 = vmatpush1.msra.mxu0 %v271
        %284 = vmatprep.subr.mxu0 0.0
        %285 = vmatpush1.msra.mxu0 %v276
        %286 = vmatprep.subr.mxu0 0.0
        %287 = vmatpush1.msra.mxu0 0.0
        %288 = vmatprep.subr.mxu0 0.0
        %289 = vmatpush1.msra.mxu0 0.0
        %290 = vmatprep.subr.mxu0 0.0
        %291 = vmatpush1.msra.mxu0 0.0
        %292 = vmatprep.subr.mxu0 0.0
        %293 = vmatpush1.msra.mxu0 0.0
        %294 = vmatprep.subr.mxu0 0.0
        %295 = vmatpush1.msra.mxu0 0.0
        %296 = vmatprep.subr.mxu0 0.0
        %297 = vmatpush1.msra.mxu0 0.0
        %298 = vmatprep.subr.mxu0 0.0
        %299 = vmatpush1.msra.mxu0 0.0
        %300 = vmatprep.subr.mxu0 0.0
        %301 = vmatpush1.msra.mxu0 0.0
        %302 = vmatprep.subr.mxu0 0.0
        %303 = vmatpush1.msra.mxu0 0.0
        %304 = vmatprep.subr.mxu0 0.0
        %305 = vmatpush1.msra.mxu0 0.0
        %306 = vmatprep.subr.mxu0 0.0
        %307 = vmatpush1.msra.mxu0 0.0
        %308 = vmatprep.subr.mxu0 0.0
        %309 = vmatpush1.msra.mxu0 0.0
        %310 = vmatprep.subr.mxu0 0.0
        %311 = vmatpush1.msra.mxu0 0.0
        %312 = vmatprep.subr.mxu0 0.0
        %313 = vmatpush1.msra.mxu0 0.0
        %314 = vmatprep.subr.mxu0 0.0
        %315 = vmatpush1.msra.mxu0 0.0
        %316 = vmatprep.subr.mxu0 0.0
        %317 = vmatpush1.msra.mxu0 0.0
        %318 = vmatprep.subr.mxu0 0.0
        %319 = vmatpush1.msra.mxu0 0.0
        %320 = vmatprep.subr.mxu0 0.0
        %321 = vmatpush1.msra.mxu0 0.0
        %322 = vmatprep.subr.mxu0 0.0
        %323 = vmatpush1.msra.mxu0 0.0
        %324 = vmatprep.subr.mxu0 0.0
        %325 = vmatpush1.msra.mxu0 0.0
        %326 = vmatprep.subr.mxu0 0.0
        %327 = vmatpush1.msra.mxu0 0.0
        %328 = vmatprep.subr.mxu0 0.0
        %329 = vmatpush1.msra.mxu0 0.0
        %330 = vmatprep.subr.mxu0 0.0
        %331 = vmatpush1.msra.mxu0 0.0
        %332 = vmatprep.subr.mxu0 0.0
        %333 = vmatpush1.msra.mxu0 0.0
        %334 = vmatprep.subr.mxu0 0.0
        %335 = vmatpush1.msra.mxu0 0.0
        %336 = vmatprep.subr.mxu0 0.0
        %337 = vmatpush1.msra.mxu0 0.0
        %338 = vmatprep.subr.mxu0 0.0
        %339 = vmatpush1.msra.mxu0 0.0
        %340 = vmatprep.subr.mxu0 0.0
        %341 = vmatpush1.msra.mxu0 0.0
        %342 = vmatprep.subr.mxu0 0.0
        %343 = vmatpush1.msra.mxu0 0.0
        %344 = vmatprep.subr.mxu0 0.0
        %345 = vmatpush1.msra.mxu0 0.0
        %346 = vmatprep.mubr.f32.mxu0 0.0
        %347 = vmatmul.mubr.f32.gmra.mrb[0].mxu0 %v280
        %v348 = vpop.f32.mrb[0].mxu0
        %v349 = vadd.f32 0.0, %v348
        %v350 = vpop.f32.mrb[0].mxu0
        %351 = vdwg.mxu0
        %vm352 = vcmask 64512
        %353 = vst.msk [vmem:[%s189] sm:$0xff] %vm352, %v349
        %s354 = scalar_lea.vmem %s167, 16 [#allocation2]
        %v355 = vld [vmem:[%s354] sm:$0xff]
        %v356 = vld [vmem:[%s354 + $0x8] sm:$0xff]
        %v358 = vsel %vm197, %v355, 0
        %v361 = vsel %vm197, %v356, 0
        %363 = vmatprep.subr.mxu0 0.0
        %364 = vmatpush1.msra.mxu0 %v193
        %365 = vmatprep.subr.mxu0 0.0
        %366 = vmatpush1.msra.mxu0 %v194
        %367 = vmatprep.subr.mxu0 0.0
        %368 = vmatpush1.msra.mxu0 0.0
        %369 = vmatprep.subr.mxu0 0.0
        %370 = vmatpush1.msra.mxu0 0.0
        %371 = vmatprep.subr.mxu0 0.0
        %372 = vmatpush1.msra.mxu0 0.0
        %373 = vmatprep.subr.mxu0 0.0
        %374 = vmatpush1.msra.mxu0 0.0
        %375 = vmatprep.subr.mxu0 0.0
        %376 = vmatpush1.msra.mxu0 0.0
        %377 = vmatprep.subr.mxu0 0.0
        %378 = vmatpush1.msra.mxu0 0.0
        %379 = vmatprep.subr.mxu0 0.0
        %380 = vmatpush1.msra.mxu0 0.0
        %381 = vmatprep.subr.mxu0 0.0
        %382 = vmatpush1.msra.mxu0 0.0
        %383 = vmatprep.subr.mxu0 0.0
        %384 = vmatpush1.msra.mxu0 0.0
        %385 = vmatprep.subr.mxu0 0.0
        %386 = vmatpush1.msra.mxu0 0.0
        %387 = vmatprep.subr.mxu0 0.0
        %388 = vmatpush1.msra.mxu0 0.0
        %389 = vmatprep.subr.mxu0 0.0
        %390 = vmatpush1.msra.mxu0 0.0
        %391 = vmatprep.subr.mxu0 0.0
        %392 = vmatpush1.msra.mxu0 0.0
        %393 = vmatprep.subr.mxu0 0.0
        %394 = vmatpush1.msra.mxu0 0.0
        %395 = vmatprep.subr.mxu0 0.0
        %396 = vmatpush1.msra.mxu0 0.0
        %397 = vmatprep.subr.mxu0 0.0
        %398 = vmatpush1.msra.mxu0 0.0
        %399 = vmatprep.subr.mxu0 0.0
        %400 = vmatpush1.msra.mxu0 0.0
        %401 = vmatprep.subr.mxu0 0.0
        %402 = vmatpush1.msra.mxu0 0.0
        %403 = vmatprep.subr.mxu0 0.0
        %404 = vmatpush1.msra.mxu0 0.0
        %405 = vmatprep.subr.mxu0 0.0
        %406 = vmatpush1.msra.mxu0 0.0
        %407 = vmatprep.subr.mxu0 0.0
        %408 = vmatpush1.msra.mxu0 0.0
        %409 = vmatprep.subr.mxu0 0.0
        %410 = vmatpush1.msra.mxu0 0.0
        %411 = vmatprep.subr.mxu0 0.0
        %412 = vmatpush1.msra.mxu0 0.0
        %413 = vmatprep.subr.mxu0 0.0
        %414 = vmatpush1.msra.mxu0 0.0
        %415 = vmatprep.subr.mxu0 0.0
        %416 = vmatpush1.msra.mxu0 0.0
        %417 = vmatprep.subr.mxu0 0.0
        %418 = vmatpush1.msra.mxu0 0.0
        %419 = vmatprep.subr.mxu0 0.0
        %420 = vmatpush1.msra.mxu0 0.0
        %421 = vmatprep.subr.mxu0 0.0
        %422 = vmatpush1.msra.mxu0 0.0
        %423 = vmatprep.subr.mxu0 0.0
        %424 = vmatpush1.msra.mxu0 0.0
        %425 = vmatprep.subr.mxu0 0.0
        %426 = vmatpush1.msra.mxu0 0.0
        %427 = vmatprep.mubr.f32.mxu0 0.0
        %428 = vmatmul.mubr.f32.gmra.mrb[0].mxu0 %v358
        %v429 = vpop.f32.mrb[0].mxu0
        %v430 = vadd.f32 0.0, %v429
        %v431 = vpop.f32.mrb[0].mxu0
        %432 = vmatprep.mubr.f32.mxu0 0.0
        %433 = vmatmul.mubr.f32.gmra.mrb[0].mxu0 %v361
        %v434 = vpop.f32.mrb[0].mxu0
        %v435 = vadd.f32 0.0, %v434
        %v436 = vpop.f32.mrb[0].mxu0
        %437 = vdwg.mxu0
        %438 = vmatprep.subr.mxu0 0.0
        %439 = vmatpush1.msra.mxu0 %v430
        %440 = vmatprep.subr.mxu0 0.0
        %441 = vmatpush1.msra.mxu0 %v435
        %442 = vmatprep.subr.mxu0 0.0
        %443 = vmatpush1.msra.mxu0 0.0
        %444 = vmatprep.subr.mxu0 0.0
        %445 = vmatpush1.msra.mxu0 0.0
        %446 = vmatprep.subr.mxu0 0.0
        %447 = vmatpush1.msra.mxu0 0.0
        %448 = vmatprep.subr.mxu0 0.0
        %449 = vmatpush1.msra.mxu0 0.0
        %450 = vmatprep.subr.mxu0 0.0
        %451 = vmatpush1.msra.mxu0 0.0
        %452 = vmatprep.subr.mxu0 0.0
        %453 = vmatpush1.msra.mxu0 0.0
        %454 = vmatprep.subr.mxu0 0.0
        %455 = vmatpush1.msra.mxu0 0.0
        %456 = vmatprep.subr.mxu0 0.0
        %457 = vmatpush1.msra.mxu0 0.0
        %458 = vmatprep.subr.mxu0 0.0
        %459 = vmatpush1.msra.mxu0 0.0
        %460 = vmatprep.subr.mxu0 0.0
        %461 = vmatpush1.msra.mxu0 0.0
        %462 = vmatprep.subr.mxu0 0.0
        %463 = vmatpush1.msra.mxu0 0.0
        %464 = vmatprep.subr.mxu0 0.0
        %465 = vmatpush1.msra.mxu0 0.0
        %466 = vmatprep.subr.mxu0 0.0
        %467 = vmatpush1.msra.mxu0 0.0
        %468 = vmatprep.subr.mxu0 0.0
        %469 = vmatpush1.msra.mxu0 0.0
        %470 = vmatprep.subr.mxu0 0.0
        %471 = vmatpush1.msra.mxu0 0.0
        %472 = vmatprep.subr.mxu0 0.0
        %473 = vmatpush1.msra.mxu0 0.0
        %474 = vmatprep.subr.mxu0 0.0
        %475 = vmatpush1.msra.mxu0 0.0
        %476 = vmatprep.subr.mxu0 0.0
        %477 = vmatpush1.msra.mxu0 0.0
        %478 = vmatprep.subr.mxu0 0.0
        %479 = vmatpush1.msra.mxu0 0.0
        %480 = vmatprep.subr.mxu0 0.0
        %481 = vmatpush1.msra.mxu0 0.0
        %482 = vmatprep.subr.mxu0 0.0
        %483 = vmatpush1.msra.mxu0 0.0
        %484 = vmatprep.subr.mxu0 0.0
        %485 = vmatpush1.msra.mxu0 0.0
        %486 = vmatprep.subr.mxu0 0.0
        %487 = vmatpush1.msra.mxu0 0.0
        %488 = vmatprep.subr.mxu0 0.0
        %489 = vmatpush1.msra.mxu0 0.0
        %490 = vmatprep.subr.mxu0 0.0
        %491 = vmatpush1.msra.mxu0 0.0
        %492 = vmatprep.subr.mxu0 0.0
        %493 = vmatpush1.msra.mxu0 0.0
        %494 = vmatprep.subr.mxu0 0.0
        %495 = vmatpush1.msra.mxu0 0.0
        %496 = vmatprep.subr.mxu0 0.0
        %497 = vmatpush1.msra.mxu0 0.0
        %498 = vmatprep.subr.mxu0 0.0
        %499 = vmatpush1.msra.mxu0 0.0
        %500 = vmatprep.subr.mxu0 0.0
        %501 = vmatpush1.msra.mxu0 0.0
        %502 = vmatprep.mubr.f32.mxu0 0.0
        %503 = vmatmul.mubr.f32.gmra.mrb[0].mxu0 %v280
        %v504 = vpop.f32.mrb[0].mxu0
        %v505 = vadd.f32 0.0, %v504
        %v506 = vpop.f32.mrb[0].mxu0
        %507 = vdwg.mxu0
        %s508 = scalar_lea.vmem %s189, 8 [#allocation5]
        %509 = vst.msk [vmem:[%s508] sm:$0xff] %vm352, %v505
        %s510 = sand.u32 %s96, 1
        %s511 = scalar_lea.sflag [#allocation4], %s510
        %s512 = sand.u32 %s96, 1
        %s513 = smul.addr %s512, 16
        %s514 = scalar_lea.vmem [#allocation5], %s513
        // Predicated region
        $region37: #{tpu_custom_call.1} parent=31 // pred_check
          %p515 = pneg %p106
        $region38: #{tpu_custom_call.1} parent=31 // pred_check_branch
          %517 = sbr.rel (%p515) target = $region40
        $region39: #{tpu_custom_call.1} parent=31 // pred_region
          %s518 = smul.u32 2, %s20
          %s520 = ssub.s32 256, 256
          %521 = vsyncadd %s511, %s520
          %s522 = smul.addr %s518, 128
          %s523 = scalar_lea.hbm %s3, %s522
          %s524 = sshll.u32 %s514, 4
          %s525 = int_to_ptr.vmem [resolvable:$true] %s524
          %530 = dma.vmem_to_hbm [thread:$0]  %s525, 256, %s523, %s511, 128, 128, 8
        $region40: #{tpu_custom_call.1} parent=31 // pred_fallthru
          _
      $region32: #{tpu_custom_call.1} parent=5 // pred_fallthru
        _
      %p531 = scmp.le.s32.totalorder 2, %s15
      // Predicated region
      $region41: #{tpu_custom_call.1} parent=5 // pred_check
        %p532 = pneg %p531
      $region42: #{tpu_custom_call.1} parent=5 // pred_check_branch
        %534 = sbr.rel (%p532) target = $region44
      $region43: #{tpu_custom_call.1} parent=5 // pred_region
        %s535 = ssub.s32 %s15, 2
        // Predicated region
        $region45: #{tpu_custom_call.1} parent=43 // pred_check
          %p536 = pneg %p112
        $region46: #{tpu_custom_call.1} parent=43 // pred_check_branch
          %538 = sbr.rel (%p536) target = $region48
        $region47: #{tpu_custom_call.1} parent=43 // pred_region
          %s539 = sand.u32 %s97, 1
          %s540 = scalar_lea.sflag [#allocation4], %s539
          %s541 = sand.u32 %s97, 1
          %s542 = smul.addr %s541, 16
          %s543 = scalar_lea.vmem [#allocation5], %s542
          %544 = dma.done %s540, 256
        $region48: #{tpu_custom_call.1} parent=43 // pred_fallthru
          _
      $region44: #{tpu_custom_call.1} parent=5 // pred_fallthru
        _
    $region6: #{tpu_custom_call.1} parent=1 // loop_footer
      %s19 = sadd.s32 1, %s15
    $region7: #{tpu_custom_call.1} parent=1 // loop_footer_branch
      %14 = sbr.rel target = $region3
    $region8: #{tpu_custom_call.1} parent=1 // loop_exit
      _
    %545 = vsyncpa [#allocation3], 1
    %s546 = scalar_lea.sflag [#allocation3], 1
    %547 = vsyncpa %s546, 1
    %548 = vsyncpa [#allocation4], 1
    %s549 = scalar_lea.sflag [#allocation4], 1
    %550 = vsyncpa %s549, 1

</llo_original>
